<compile_context>
chip_gen: v6e
topology: v6e:2x2x1
jax: 0.10.0
libtpu: 0.0.40
codegen_flags: <defaults>
</compile_context>

<pallas_src>
import functools

import jax
import jax.numpy as jnp
from jax.experimental import pallas as pl
from jax.experimental.pallas import tpu as pltpu


def _round_up(x, m):
    return (x + m - 1) // m * m


def _layernorm_kernel(x_ref, gamma_ref, beta_ref, o_ref, *, eps):
    # x_ref/o_ref block: (block_rows, L); gamma_ref/beta_ref block: (block_rows, 1)
    x = x_ref[...].astype(jnp.float32)                          # (R_blk, L)
    L = x.shape[-1]

    mean = jnp.mean(x, axis=-1, keepdims=True)                  # (R_blk, 1)
    centered = x - mean
    # torch.std is the unbiased estimator (divide by L-1), then sqrt.
    var = jnp.sum(centered * centered, axis=-1, keepdims=True) * jnp.float32(
        1.0 / (L - 1)
    )
    std = jnp.sqrt(var)                                         # (R_blk, 1)

    # Fold gamma and the divide into one per-row scale: one tiny (R_blk, 1)
    # reciprocal (EUP) + one mul/add per element.  approx=False keeps the
    # exact 1/(std+eps) so results match the reference to <=1e-5.
    inv = pl.reciprocal(std + jnp.float32(eps), approx=False)   # (R_blk, 1)
    scale = gamma_ref[...].astype(jnp.float32) * inv            # (R_blk, 1)
    shift = beta_ref[...].astype(jnp.float32)                   # (R_blk, 1)

    # Re-read x_ref for the output so the reduction's `centered` temporary does
    # not need to stay live (materialized block-sized f32 in VMEM) across the
    # store.  Per-element output work: one sub, one mul, one add, one store.
    x2 = x_ref[...].astype(jnp.float32)
    o_ref[...] = ((x2 - mean) * scale + shift).astype(o_ref.dtype)


def layer_norm(x, gamma, beta, eps=1e-8, block_rows=None):
    """x: (B, C, L); gamma, beta: (C,). Returns (B, C, L).

    Precondition: L >= 2 (unbiased std divides by L - 1, exactly like
    torch.std, which is nan/inf on a length-1 axis).
    """
    B, C, L = x.shape
    if L < 2:
        raise ValueError("LayerNorm with unbiased std (ddof=1) requires L >= 2.")

    R = B * C
    x2d = x.reshape(R, L)
    # Per-row affine params (gamma/beta broadcast over the batch dim).  Extra
    # HBM traffic is R*4 bytes per array -- negligible vs the R*L*itemsize of x.
    g_rows = jnp.broadcast_to(gamma.reshape(1, C), (B, C)).reshape(R, 1).astype(jnp.float32)
    b_rows = jnp.broadcast_to(beta.reshape(1, C), (B, C)).reshape(R, 1).astype(jnp.float32)

    x_item = jnp.dtype(x.dtype).itemsize
    # Sublane multiple required when tiling the second-to-last (rows) dim.
    sublane = {4: 8, 2: 16, 1: 32}.get(x_item, 8)

    # ---- VMEM residency per row of one block, using PADDED footprints. ----
    # The lane (last) dim of every VMEM tile pads to a multiple of 128, so a
    # (rows, L) tile occupies rows * round_up(L, 128) lanes and every (rows, 1)
    # column occupies rows * 128 lanes.
    L_pad = _round_up(L, 128)
    col_pad_bytes = 128 * 4  # one padded (rows, 1) f32 column, per row
    bytes_per_row = (
        L_pad * (2 * x_item      # double-buffered input block
                 + 2 * x_item    # double-buffered output block
                 + 2 * 4)        # ~2 block-sized f32 temporaries (upcast / centered)
        + col_pad_bytes * (2 * 2  # gamma + beta blocks, double-buffered
                           + 4)   # a few live (rows, 1) f32 temps (mean/std/scale/...)
    )

    vmem_limit_bytes = 48 * 1024 * 1024     # < v7x 64 MiB physical; > v5e/v6e scoped defaults
    resident_budget = 36 * 1024 * 1024      # leave headroom under the scoped limit

    min_rows = sublane if R > sublane else R
    if min_rows * bytes_per_row > resident_budget:
        # TODO(synk): tile L with a two-pass sum / sum-of-squares accumulator for
        # extremely long rows instead of refusing.
        raise ValueError(
            f"L={L} is too large to fit a single legal row-block "
            f"({min_rows} rows) in the {resident_budget >> 20} MiB VMEM budget."
        )

    if block_rows is None:
        block_rows = resident_budget // bytes_per_row

    if block_rows >= R:
        block_rows = R  # full extent: no sublane-divisibility requirement
        # v7x has 2 TensorCores: give the 'parallel' grid axis >= 2 blocks when
        # the row count allows a legal (sublane-multiple) split.
        if R >= 2 * sublane:
            block_rows = _round_up(pl.cdiv(R, 2), sublane)
    else:
        block_rows = max(sublane, (block_rows // sublane) * sublane)

    grid = (pl.cdiv(R, block_rows),)

    # Mem-bound roofline hint: read x once, write out once, ~7 flops/element,
    # one sqrt + one reciprocal per row.  No MXU.
    cost = pl.CostEstimate(
        flops=7 * R * L,
        transcendentals=2 * R,
        bytes_accessed=2 * R * L * x_item + 2 * R * 4,
    )

    kernel = functools.partial(_layernorm_kernel, eps=eps)
    out2d = pl.pallas_call(
        kernel,
        out_shape=jax.ShapeDtypeStruct((R, L), x.dtype),
        grid=grid,
        in_specs=[
            pl.BlockSpec((block_rows, L), lambda i: (i, 0)),
            pl.BlockSpec((block_rows, 1), lambda i: (i, 0)),
            pl.BlockSpec((block_rows, 1), lambda i: (i, 0)),
        ],
        out_specs=pl.BlockSpec((block_rows, L), lambda i: (i, 0)),
        compiler_params=pltpu.CompilerParams(
            dimension_semantics=("parallel",),
            vmem_limit_bytes=vmem_limit_bytes,
        ),
        cost_estimate=cost,
    )(x2d, g_rows, b_rows)

    return out2d.reshape(B, C, L)


def layer_norm_ref(x, gamma, beta, eps=1e-8):
    """Pure-JAX reference mirroring the PyTorch forward."""
    mean = jnp.mean(x, axis=-1, keepdims=True)
    std = jnp.std(x, axis=-1, keepdims=True, ddof=1)  # unbiased, like torch.std
    return gamma.reshape(1, -1, 1) * (x - mean) / (std + eps) + beta.reshape(1, -1, 1)


if __name__ == "__main__":
    key = jax.random.PRNGKey(0)

    B, C, L = 2, 4, 32          # (batch, features/channels, seq)
    eps = 1e-8

    x = jax.random.normal(key, (B, C, L), dtype=jnp.float32)
    # Deterministic parameter init, matching nn.Parameter(torch.ones / torch.zeros).
    gamma = jnp.ones((C,), dtype=jnp.float32)
    beta = jnp.zeros((C,), dtype=jnp.float32)

    out = layer_norm(x, gamma, beta, eps=eps)
    out = jax.block_until_ready(out)

    ref = layer_norm_ref(x, gamma, beta, eps=eps)
    assert out.shape == (B, C, L)
    assert jnp.allclose(out, ref, atol=1e-5, rtol=1e-5), "mismatch vs reference"

    print("KERNEL_OK")
</pallas_src>

<mosaic_0001>
module attributes {stable_mosaic.version = 11 : i64} {
  func.func @_layernorm_kernel(%arg0: i32, %arg1: memref<8x32xf32, #tpu.memory_space<vmem>>, %arg2: memref<8x1xf32, #tpu.memory_space<vmem>>, %arg3: memref<8x1xf32, #tpu.memory_space<vmem>>, %arg4: memref<8x32xf32, #tpu.memory_space<vmem>>) attributes {dimension_semantics = [#tpu.dimension_semantics<parallel>], iteration_bounds = array<i64: 1>, scalar_prefetch = 0 : i64, scratch_operands = 0 : i64, tpu.core_type = #tpu.core_type<tc>, window_params = [{transform_indices = @transform_0, window_bounds = array<i64: 8, 32>}, {transform_indices = @transform_1, window_bounds = array<i64: 8, 1>}, {transform_indices = @transform_2, window_bounds = array<i64: 8, 1>}, {transform_indices = @transform_3, window_bounds = array<i64: 8, 32>}]} {
    %c0 = arith.constant 0 : index
    %c0_0 = arith.constant 0 : index
    %0 = vector.load %arg1[%c0, %c0_0] : memref<8x32xf32, #tpu.memory_space<vmem>>, vector<8x32xf32>
    %cst = arith.constant dense<0.000000e+00> : vector<8xf32>
    %1 = vector.multi_reduction <add>, %0, %cst [1] : vector<8x32xf32> to vector<8xf32>
    %2 = vector.shape_cast %1 : vector<8xf32> to vector<8x1xf32>
    %cst_1 = arith.constant 3.200000e+01 : f32
    %3 = vector.broadcast %cst_1 : f32 to vector<8x1xf32>
    %4 = arith.divf %2, %3 : vector<8x1xf32>
    %5 = vector.broadcast %4 : vector<8x1xf32> to vector<8x32xf32>
    %6 = arith.subf %0, %5 : vector<8x32xf32>
    %7 = arith.mulf %6, %6 : vector<8x32xf32>
    %cst_2 = arith.constant dense<0.000000e+00> : vector<8xf32>
    %8 = vector.multi_reduction <add>, %7, %cst_2 [1] : vector<8x32xf32> to vector<8xf32>
    %9 = vector.shape_cast %8 : vector<8xf32> to vector<8x1xf32>
    %cst_3 = arith.constant 0.0322580636 : f32
    %10 = vector.broadcast %cst_3 : f32 to vector<8x1xf32>
    %11 = arith.mulf %9, %10 : vector<8x1xf32>
    %12 = math.sqrt %11 : vector<8x1xf32>
    %cst_4 = arith.constant 9.99999993E-9 : f32
    %13 = vector.broadcast %cst_4 : f32 to vector<8x1xf32>
    %14 = arith.addf %12, %13 : vector<8x1xf32>
    %15 = tpu.reciprocal %14 : vector<8x1xf32> -> vector<8x1xf32>
    %c0_5 = arith.constant 0 : index
    %c0_6 = arith.constant 0 : index
    %16 = vector.load %arg2[%c0_5, %c0_6] : memref<8x1xf32, #tpu.memory_space<vmem>>, vector<8x1xf32>
    %17 = arith.mulf %16, %15 : vector<8x1xf32>
    %c0_7 = arith.constant 0 : index
    %c0_8 = arith.constant 0 : index
    %18 = vector.load %arg3[%c0_7, %c0_8] : memref<8x1xf32, #tpu.memory_space<vmem>>, vector<8x1xf32>
    %c0_9 = arith.constant 0 : index
    %c0_10 = arith.constant 0 : index
    %19 = vector.load %arg1[%c0_9, %c0_10] : memref<8x32xf32, #tpu.memory_space<vmem>>, vector<8x32xf32>
    %20 = vector.broadcast %4 : vector<8x1xf32> to vector<8x32xf32>
    %21 = arith.subf %19, %20 : vector<8x32xf32>
    %22 = vector.broadcast %17 : vector<8x1xf32> to vector<8x32xf32>
    %23 = arith.mulf %21, %22 : vector<8x32xf32>
    %24 = vector.broadcast %18 : vector<8x1xf32> to vector<8x32xf32>
    %25 = arith.addf %23, %24 : vector<8x32xf32>
    %c0_11 = arith.constant 0 : index
    %c0_12 = arith.constant 0 : index
    %26 = vector.load %arg4[%c0_11, %c0_12] : memref<8x32xf32, #tpu.memory_space<vmem>>, vector<8x32xf32>
    tpu.vector_store %arg4[%c0_11, %c0_12], %25 {strides = array<i32>} : memref<8x32xf32, #tpu.memory_space<vmem>>, vector<8x32xf32>,
    return
  }
  func.func @transform_0(%arg0: i32) -> (i32, i32) {
    %c0_i32 = arith.constant 0 : i32
    %c0_i32_0 = arith.constant 0 : i32
    return %arg0, %c0_i32 : i32, i32
  }
  func.func @transform_1(%arg0: i32) -> (i32, i32) {
    %c0_i32 = arith.constant 0 : i32
    %c0_i32_0 = arith.constant 0 : i32
    return %arg0, %c0_i32 : i32, i32
  }
  func.func @transform_2(%arg0: i32) -> (i32, i32) {
    %c0_i32 = arith.constant 0 : i32
    %c0_i32_0 = arith.constant 0 : i32
    return %arg0, %c0_i32 : i32, i32
  }
  func.func @transform_3(%arg0: i32) -> (i32, i32) {
    %c0_i32 = arith.constant 0 : i32
    %c0_i32_0 = arith.constant 0 : i32
    return %arg0, %c0_i32 : i32, i32
  }
}

</mosaic_0001>

<llo_original>
// kernel: tpu_custom_call.1
$region0: #{tpu_custom_call.1}
  #allocation0 [shape = 'u32[]', space=smem, size = 0x4, offset = 0x4, fixed_abs, tag = 'smem constant byte address 0x4 - core index']
  #allocation1 [shape = 'u32[144,128]{1,0:T(1,128)}', space=vmem, size = 0x12000, scoped, tag = 'internal scratch']
  %s0 = inlined_call_operand.vmem [shape: f32[8,32], index: 0, kind: input, shape index: {}]
  %s1 = inlined_call_operand.vmem [shape: f32[8,1], index: 1, kind: input, shape index: {}]
  %s2 = inlined_call_operand.vmem [shape: f32[8,1], index: 2, kind: input, shape index: {}]
  %s3 = inlined_call_operand.hbm [shape: f32[8,32], index: 3, kind: output, shape index: {}]
  %s4 = sld [smem:[#allocation0]]
  $region22: #{tpu_custom_call.1} parent=0
    _
  %s6 = ssub.s32 1, %s4
  %s7 = scalar_select 0, %s6, %s4
  $region1: #{tpu_custom_call.1} parent=0
    #allocation2 [shape = 'u8[4096]{0}', space=vmem, size = 0x1000, scoped, tag = 'output window, operand 0, single buffered']
    #allocation3 [shape = 's32[1]{0}', space=sflag, size = 0x4, scoped, tag = 'scoped memory for tpu_custom_call.1']
    %8 = vsyncpa [#allocation3], 0
    // Predicated region
    $region2: #{tpu_custom_call.1} parent=1 // pred_check
      _
    $region3: #{tpu_custom_call.1} parent=1 // pred_check_branch
      %10 = sbr.rel (0) target = $region5
    $region4: #{tpu_custom_call.1} parent=1 // pred_region
      _
    $region5: #{tpu_custom_call.1} parent=1 // pred_fallthru
      _
    // Predicated region
    $region6: #{tpu_custom_call.1} parent=1 // pred_check
      _
    $region7: #{tpu_custom_call.1} parent=1 // pred_check_branch
      %12 = sbr.rel (0) target = $region9
    $region8: #{tpu_custom_call.1} parent=1 // pred_region
      _
    $region9: #{tpu_custom_call.1} parent=1 // pred_fallthru
      _
    // Predicated region
    $region10: #{tpu_custom_call.1} parent=1 // pred_check
      _
    $region11: #{tpu_custom_call.1} parent=1 // pred_check_branch
      %14 = sbr.rel (0) target = $region13
    $region12: #{tpu_custom_call.1} parent=1 // pred_region
      _
    $region13: #{tpu_custom_call.1} parent=1 // pred_fallthru
      _
    %v15 = vld [vmem:[%s0] sm:$0xff]
    %vm16 = vcmask 261120
    %v17 = vsel %vm16, %v15, 0.0
    %18 = vadd.xlane.f32.xlu0 %v17
    %v19 = vpop.xlane.xlu0 %18
    %v20 = vrcp.pop 32.0
    %v21 = vmul.f32 %v19, %v20
    %v22 = vsub.f32 %v15, %v21
    %v23 = vmul.f32 %v22, %v22
    %v24 = vsel %vm16, %v23, 0.0
    %25 = vadd.xlane.f32.xlu0 %v24
    %v26 = vpop.xlane.xlu0 %25
    %v27 = vmul.f32 %v26, 0.032258064
    %v28 = vrsqrt.pop %v27
    %v29 = vmul.f32 %v27, %v28
    %vm30 = vcmp.eq.f32.partialorder %v27, inf
    %v31 = vsel %vm30, %v27, %v29
    %vm32 = vcmp.eq.f32.partialorder %v27, 0.0
    %v33 = vand.u32 %v27, 2147483648
    %v34 = vsel %vm32, %v33, %v31
    %v35 = vadd.f32 %v34, 1e-08
    %v36 = vrcp.pop %v35
    %v37 = vld [vmem:[%s1] sm:$0xff]
    %v38 = vmul.f32 %v37, %v36
    %v39 = vld [vmem:[%s2] sm:$0xff]
    %41 = vset.pattern.permute.xlu0 0
    %42 = vperm.xlu0 %41, %v38
    %v43 = vpop.permute.xlu0 %42
    %v45 = vmul.f32 %v22, %v43
    %47 = vset.pattern.permute.xlu0 0
    %48 = vperm.xlu0 %47, %v39
    %v49 = vpop.permute.xlu0 %48
    %v51 = vadd.f32 %v45, %v49
    %52 = vst.msk [vmem:[#allocation2] sm:$0xff] %vm16, %v51
    // Predicated region
    $region14: #{tpu_custom_call.1} parent=1 // pred_check
      _
    $region15: #{tpu_custom_call.1} parent=1 // pred_check_branch
      %54 = sbr.rel (0) target = $region17
    $region16: #{tpu_custom_call.1} parent=1 // pred_region
      %s56 = ssub.s32 128, 128
      %57 = vsyncadd [#allocation3], %s56
      %s59 = sshll.u32 [#allocation2], 4
      %s60 = int_to_ptr.vmem [resolvable:$true] %s59
      %62 = dma.vmem_to_hbm [thread:$0]  %s60, 128, %s3, [#allocation3]
    $region17: #{tpu_custom_call.1} parent=1 // pred_fallthru
      _
    // Predicated region
    $region18: #{tpu_custom_call.1} parent=1 // pred_check
      _
    $region19: #{tpu_custom_call.1} parent=1 // pred_check_branch
      %64 = sbr.rel (0) target = $region21
    $region20: #{tpu_custom_call.1} parent=1 // pred_region
      %65 = dma.done [#allocation3], 128
    $region21: #{tpu_custom_call.1} parent=1 // pred_fallthru
      _
    %66 = vsyncpa [#allocation3], 1

</llo_original>
